<compile_context>
chip_gen: v7x
topology: tpu7x:2x2x1
jax: 0.10.0
libtpu: 0.0.40
codegen_flags: <defaults>
</compile_context>

<pallas_src>
import functools

import jax
import jax.numpy as jnp
from jax.experimental import pallas as pl
from jax.experimental.pallas import tpu as pltpu

EPS = 1e-5  # nn.BatchNorm2d default eps


def _round_up(x, m):
    return (x + m - 1) // m * m


def _basic_class_kernel(n_valid, spatial, mxu_dtype,
                        x_ref, g1_ref, b1_ref, wf_ref, bc_ref,
                        g2_ref, b2_ref, fw_ref, fb_ref, o_ref):
    """Fused BN1 -> conv(1x1 out) -> BN2 -> ELU -> fc on one VMEM-resident block.

    x_ref: (Np, D) f32, D = P*C, column order (h*W + w)*C + c.
    Rows >= n_valid are zero padding and are excluded from batch statistics.
    """
    P = spatial
    x = x_ref[...]                                   # (Np, D)
    Np, D = x.shape
    C = D // P

    # mask of real (non-padding) batch rows
    row_id = jax.lax.broadcasted_iota(jnp.int32, (Np, 1), 0)
    valid = (row_id < n_valid).astype(jnp.float32)   # (Np, 1)

    def channel_reduce(row):                         # (1, D) -> (1, C)
        acc = row[:, 0:C]
        for p in range(1, P):                        # static unroll over spatial
            acc = acc + row[:, p * C:(p + 1) * C]
        return acc

    def channel_tile(vec):                           # (1, C) -> (1, D), period C
        if P == 1:
            return vec
        return jnp.concatenate([vec] * P, axis=1)

    # ---- BatchNorm2d #1: training mode, biased var, centered two-pass ----
    inv_cnt1 = 1.0 / float(n_valid * P)
    mean1 = channel_reduce(jnp.sum(x, axis=0, keepdims=True)) * inv_cnt1   # (1, C)
    mean1_cols = channel_tile(mean1)                                       # (1, D)
    xc = x - mean1_cols
    d = xc * valid                                   # exclude padded rows from var
    var1 = channel_reduce(jnp.sum(d * d, axis=0, keepdims=True)) * inv_cnt1
    scale1 = g1_ref[...] * jax.lax.rsqrt(var1 + EPS)                       # (1, C)
    xn = xc * channel_tile(scale1) + channel_tile(b1_ref[...])             # (Np, D)

    # ---- Conv2d (output spatial 1x1) == one MXU matmul + bias ----
    y = jnp.dot(xn.astype(mxu_dtype), wf_ref[...],
                preferred_element_type=jnp.float32) + bc_ref[...]          # (Np, O)

    # ---- BatchNorm2d #2 (1x1 spatial -> stats over the real batch rows) ----
    inv_n = 1.0 / float(n_valid)
    mean2 = jnp.sum(y * valid, axis=0, keepdims=True) * inv_n              # (1, O)
    d2 = (y - mean2) * valid
    var2 = jnp.sum(d2 * d2, axis=0, keepdims=True) * inv_n
    scale2 = g2_ref[...] * jax.lax.rsqrt(var2 + EPS)
    y2 = (y - mean2) * scale2 + b2_ref[...]

    # ---- ELU(alpha=1) ----  (exp is the EUP-native path; expm1 only marginal)
    e = jnp.where(y2 > 0, y2, jnp.exp(jnp.minimum(y2, 0.0)) - 1.0)

    # ---- Linear (fc), lane-dense padded output ----
    o_ref[...] = jnp.dot(e.astype(mxu_dtype), fw_ref[...],
                         preferred_element_type=jnp.float32) + fb_ref[...]


def basic_class_forward(x, params, mxu_dtype=jnp.bfloat16):
    """x: (N, C, H, W) float32 (NCHW, PyTorch layout)."""
    N, C, H, W = x.shape
    conv_w = params["conv_w"]                        # (O, C, K, K)
    O, Cw, K, K2 = conv_w.shape
    assert Cw == C and K == K2
    assert H == K and W == K, "fc(in=out_channel) needs conv output spatial 1x1"
    P = H * W
    D = P * C
    CLS = params["fc_w"].shape[0]

    Np = _round_up(N, 8)        # sublane-dense batch (pad rows excluded from stats)
    CLSp = _round_up(CLS, 128)  # lane-dense output -> unmasked vst on store path

    # Layout glue (plain JAX): NCHW -> channels-last patch flattening (N, P*C).
    # TODO(synk): for large inputs accept NHWC (or gather patches via a BlockSpec
    # index_map) so x is not rewritten by an XLA transpose before the kernel.
    x_nf = jnp.transpose(x, (0, 2, 3, 1)).reshape(N, D).astype(jnp.float32)
    x_nf = jnp.pad(x_nf, ((0, Np - N), (0, 0)))

    # conv weight (O,C,K,K) -> (K*K*C, O) matching x_nf's column order; weights
    # ship in the MXU operand dtype (halves weight VMEM/HBM traffic for bf16).
    wf = jnp.transpose(conv_w, (2, 3, 1, 0)).reshape(D, O).astype(mxu_dtype)
    bc = params["conv_b"].reshape(1, O).astype(jnp.float32)
    g1 = params["bn1_g"].reshape(1, C).astype(jnp.float32)
    b1 = params["bn1_b"].reshape(1, C).astype(jnp.float32)
    g2 = params["bn2_g"].reshape(1, O).astype(jnp.float32)
    b2 = params["bn2_b"].reshape(1, O).astype(jnp.float32)
    fw = jnp.pad(params["fc_w"].astype(jnp.float32).T,
                 ((0, 0), (0, CLSp - CLS))).astype(mxu_dtype)              # (O, CLSp)
    fb = jnp.pad(params["fc_b"].astype(jnp.float32).reshape(1, CLS),
                 ((0, 0), (0, CLSp - CLS)))                                # (1, CLSp)

    operands = (x_nf, g1, b1, wf, bc, g2, b2, fw, fb)

    # VMEM budget: the whole (padded) batch is resident in one fused block.
    # Verify it comfortably fits the smallest-physical-VMEM target (v7x: 64 MiB)
    # and tell Mosaic the real requirement instead of relying on the scoped
    # default (16 MiB v5e / 32 MiB v6e+v7x).
    total_bytes = sum(int(a.size) * a.dtype.itemsize for a in operands)
    total_bytes += Np * CLSp * 4                     # output block
    assert total_bytes <= 48 * 1024 * 1024, (
        "activation slab too large for a single fused block; needs the "
        "batch-tiled multi-pass variant")
    # TODO(synk): for batches whose activations exceed VMEM, split into a
    # 3-phase batch-tiled pipeline (BN1-stat sweep / conv+BN2-stat sweep /
    # normalize+ELU+fc sweep) with a 'parallel' batch grid so both v7x
    # TensorCores are used.
    vmem_limit = int(min(max(2 * total_bytes + (1 << 20), 4 << 20), 64 << 20))

    kernel = functools.partial(_basic_class_kernel, int(N), int(P), mxu_dtype)
    vmem = pl.BlockSpec(memory_space=pltpu.MemorySpace.VMEM)
    out = pl.pallas_call(
        kernel,
        out_shape=jax.ShapeDtypeStruct((Np, CLSp), jnp.float32),
        in_specs=[vmem] * len(operands),
        out_specs=vmem,
        compiler_params=pltpu.CompilerParams(vmem_limit_bytes=vmem_limit),
    )(*operands)
    return out[:N, :CLS]


def reference_forward(x, params):
    """Pure-JAX reference mirroring the PyTorch forward (training-mode BN)."""
    m1 = x.mean(axis=(0, 2, 3))
    v1 = x.var(axis=(0, 2, 3))
    xh = ((x - m1[None, :, None, None])
          * (params["bn1_g"] / jnp.sqrt(v1 + EPS))[None, :, None, None]
          + params["bn1_b"][None, :, None, None])
    y = jnp.einsum("nchw,ochw->no", xh, params["conv_w"]) + params["conv_b"][None, :]
    m2 = y.mean(axis=0)
    v2 = y.var(axis=0)
    y2 = (y - m2) * (params["bn2_g"] / jnp.sqrt(v2 + EPS)) + params["bn2_b"]
    e = jnp.where(y2 > 0, y2, jnp.exp(jnp.minimum(y2, 0.0)) - 1.0)
    return e @ params["fc_w"].T + params["fc_b"]


if __name__ == "__main__":
    # Shapes consistent with the module: conv output spatial must be 1x1, so
    # spatial == kernel_size with stride=1.
    N, C, H, W = 4, 4, 4, 4       # batch=4, in_channel=4, spatial=4x4
    O, K, CLS = 8, 4, 10          # out_channel=8, kernel_size=4, class_num=10

    key = jax.random.PRNGKey(0)
    ks = jax.random.split(key, 8)
    x = jax.random.normal(ks[0], (N, C, H, W), jnp.float32)
    params = dict(
        bn1_g=jax.random.uniform(ks[1], (C,), jnp.float32, 0.5, 1.5),
        bn1_b=0.1 * jax.random.normal(ks[2], (C,), jnp.float32),
        conv_w=jax.random.normal(ks[3], (O, C, K, K), jnp.float32) / (C * K * K) ** 0.5,
        conv_b=0.1 * jax.random.normal(ks[4], (O,), jnp.float32),
        bn2_g=jax.random.uniform(ks[5], (O,), jnp.float32, 0.5, 1.5),
        bn2_b=0.1 * jax.random.normal(ks[6], (O,), jnp.float32),
        fc_w=jax.random.normal(ks[7], (CLS, O), jnp.float32) / O ** 0.5,
        fc_b=jnp.zeros((CLS,), jnp.float32),
    )

    ref = reference_forward(x, params)

    # exact path: f32 MXU operands, tight check against the f32 reference
    out_f32 = jax.block_until_ready(basic_class_forward(x, params, mxu_dtype=jnp.float32))
    assert out_f32.shape == (N, CLS), out_f32.shape
    assert jnp.allclose(out_f32, ref, atol=1e-3, rtol=1e-3), (out_f32, ref)

    # default perf path: bf16 MXU operands (f32 accumulate, f32 elementwise);
    # loose sanity check against the exact path
    out_bf16 = jax.block_until_ready(basic_class_forward(x, params))
    assert out_bf16.shape == (N, CLS), out_bf16.shape
    assert jnp.allclose(out_bf16, out_f32, atol=5e-2, rtol=5e-2), (out_bf16, out_f32)

    print("KERNEL_OK")
</pallas_src>

<mosaic_0001>
module attributes {stable_mosaic.version = 11 : i64} {
  func.func @_basic_class_kernel(%arg0: memref<8x64xf32, #tpu.memory_space<vmem>>, %arg1: memref<1x4xf32, #tpu.memory_space<vmem>>, %arg2: memref<1x4xf32, #tpu.memory_space<vmem>>, %arg3: memref<64x8xf32, #tpu.memory_space<vmem>>, %arg4: memref<1x8xf32, #tpu.memory_space<vmem>>, %arg5: memref<1x8xf32, #tpu.memory_space<vmem>>, %arg6: memref<1x8xf32, #tpu.memory_space<vmem>>, %arg7: memref<8x128xf32, #tpu.memory_space<vmem>>, %arg8: memref<1x128xf32, #tpu.memory_space<vmem>>, %arg9: memref<8x128xf32, #tpu.memory_space<vmem>>) attributes {dimension_semantics = [], scalar_prefetch = 0 : i64, scratch_operands = 0 : i64, tpu.core_type = #tpu.core_type<tc>} {
    %c0 = arith.constant 0 : index
    %c0_0 = arith.constant 0 : index
    %0 = vector.load %arg0[%c0, %c0_0] : memref<8x64xf32, #tpu.memory_space<vmem>>, vector<8x64xf32>
    %1 = tpu.iota {dimensions = array<i32: 0>} : vector<8x1xi32>
    %c4_i32 = arith.constant 4 : i32
    %2 = vector.broadcast %c4_i32 : i32 to vector<8x1xi32>
    %3 = arith.cmpi slt, %1, %2 : vector<8x1xi32>
    %4 = arith.extui %3 : vector<8x1xi1> to vector<8x1xi32>
    %5 = arith.sitofp %4 : vector<8x1xi32> to vector<8x1xf32>
    %cst = arith.constant dense<0.000000e+00> : vector<64xf32>
    %6 = vector.multi_reduction <add>, %0, %cst [0] : vector<8x64xf32> to vector<64xf32>
    %7 = vector.shape_cast %6 : vector<64xf32> to vector<1x64xf32>
    %8 = vector.extract_strided_slice %7 {offsets = [0, 0], sizes = [1, 4], strides = [1, 1]} : vector<1x64xf32> to vector<1x4xf32>
    %9 = vector.extract_strided_slice %7 {offsets = [0, 4], sizes = [1, 4], strides = [1, 1]} : vector<1x64xf32> to vector<1x4xf32>
    %10 = arith.addf %8, %9 : vector<1x4xf32>
    %11 = vector.extract_strided_slice %7 {offsets = [0, 8], sizes = [1, 4], strides = [1, 1]} : vector<1x64xf32> to vector<1x4xf32>
    %12 = arith.addf %10, %11 : vector<1x4xf32>
    %13 = vector.extract_strided_slice %7 {offsets = [0, 12], sizes = [1, 4], strides = [1, 1]} : vector<1x64xf32> to vector<1x4xf32>
    %14 = arith.addf %12, %13 : vector<1x4xf32>
    %15 = vector.extract_strided_slice %7 {offsets = [0, 16], sizes = [1, 4], strides = [1, 1]} : vector<1x64xf32> to vector<1x4xf32>
    %16 = arith.addf %14, %15 : vector<1x4xf32>
    %17 = vector.extract_strided_slice %7 {offsets = [0, 20], sizes = [1, 4], strides = [1, 1]} : vector<1x64xf32> to vector<1x4xf32>
    %18 = arith.addf %16, %17 : vector<1x4xf32>
    %19 = vector.extract_strided_slice %7 {offsets = [0, 24], sizes = [1, 4], strides = [1, 1]} : vector<1x64xf32> to vector<1x4xf32>
    %20 = arith.addf %18, %19 : vector<1x4xf32>
    %21 = vector.extract_strided_slice %7 {offsets = [0, 28], sizes = [1, 4], strides = [1, 1]} : vector<1x64xf32> to vector<1x4xf32>
    %22 = arith.addf %20, %21 : vector<1x4xf32>
    %23 = vector.extract_strided_slice %7 {offsets = [0, 32], sizes = [1, 4], strides = [1, 1]} : vector<1x64xf32> to vector<1x4xf32>
    %24 = arith.addf %22, %23 : vector<1x4xf32>
    %25 = vector.extract_strided_slice %7 {offsets = [0, 36], sizes = [1, 4], strides = [1, 1]} : vector<1x64xf32> to vector<1x4xf32>
    %26 = arith.addf %24, %25 : vector<1x4xf32>
    %27 = vector.extract_strided_slice %7 {offsets = [0, 40], sizes = [1, 4], strides = [1, 1]} : vector<1x64xf32> to vector<1x4xf32>
    %28 = arith.addf %26, %27 : vector<1x4xf32>
    %29 = vector.extract_strided_slice %7 {offsets = [0, 44], sizes = [1, 4], strides = [1, 1]} : vector<1x64xf32> to vector<1x4xf32>
    %30 = arith.addf %28, %29 : vector<1x4xf32>
    %31 = vector.extract_strided_slice %7 {offsets = [0, 48], sizes = [1, 4], strides = [1, 1]} : vector<1x64xf32> to vector<1x4xf32>
    %32 = arith.addf %30, %31 : vector<1x4xf32>
    %33 = vector.extract_strided_slice %7 {offsets = [0, 52], sizes = [1, 4], strides = [1, 1]} : vector<1x64xf32> to vector<1x4xf32>
    %34 = arith.addf %32, %33 : vector<1x4xf32>
    %35 = vector.extract_strided_slice %7 {offsets = [0, 56], sizes = [1, 4], strides = [1, 1]} : vector<1x64xf32> to vector<1x4xf32>
    %36 = arith.addf %34, %35 : vector<1x4xf32>
    %37 = vector.extract_strided_slice %7 {offsets = [0, 60], sizes = [1, 4], strides = [1, 1]} : vector<1x64xf32> to vector<1x4xf32>
    %38 = arith.addf %36, %37 : vector<1x4xf32>
    %cst_1 = arith.constant 1.562500e-02 : f32
    %39 = vector.broadcast %cst_1 : f32 to vector<1x4xf32>
    %40 = arith.mulf %38, %39 : vector<1x4xf32>
    %41 = tpu.concatenate %40, %40, %40, %40, %40, %40, %40, %40, %40, %40, %40, %40, %40, %40, %40, %40 in 1 : vector<1x4xf32>, vector<1x4xf32>, vector<1x4xf32>, vector<1x4xf32>, vector<1x4xf32>, vector<1x4xf32>, vector<1x4xf32>, vector<1x4xf32>, vector<1x4xf32>, vector<1x4xf32>, vector<1x4xf32>, vector<1x4xf32>, vector<1x4xf32>, vector<1x4xf32>, vector<1x4xf32>, vector<1x4xf32> -> vector<1x64xf32>
    %42 = vector.broadcast %41 : vector<1x64xf32> to vector<8x64xf32>
    %43 = arith.subf %0, %42 : vector<8x64xf32>
    %44 = vector.broadcast %5 : vector<8x1xf32> to vector<8x64xf32>
    %45 = arith.mulf %43, %44 : vector<8x64xf32>
    %46 = arith.mulf %45, %45 : vector<8x64xf32>
    %cst_2 = arith.constant dense<0.000000e+00> : vector<64xf32>
    %47 = vector.multi_reduction <add>, %46, %cst_2 [0] : vector<8x64xf32> to vector<64xf32>
    %48 = vector.shape_cast %47 : vector<64xf32> to vector<1x64xf32>
    %49 = vector.extract_strided_slice %48 {offsets = [0, 0], sizes = [1, 4], strides = [1, 1]} : vector<1x64xf32> to vector<1x4xf32>
    %50 = vector.extract_strided_slice %48 {offsets = [0, 4], sizes = [1, 4], strides = [1, 1]} : vector<1x64xf32> to vector<1x4xf32>
    %51 = arith.addf %49, %50 : vector<1x4xf32>
    %52 = vector.extract_strided_slice %48 {offsets = [0, 8], sizes = [1, 4], strides = [1, 1]} : vector<1x64xf32> to vector<1x4xf32>
    %53 = arith.addf %51, %52 : vector<1x4xf32>
    %54 = vector.extract_strided_slice %48 {offsets = [0, 12], sizes = [1, 4], strides = [1, 1]} : vector<1x64xf32> to vector<1x4xf32>
    %55 = arith.addf %53, %54 : vector<1x4xf32>
    %56 = vector.extract_strided_slice %48 {offsets = [0, 16], sizes = [1, 4], strides = [1, 1]} : vector<1x64xf32> to vector<1x4xf32>
    %57 = arith.addf %55, %56 : vector<1x4xf32>
    %58 = vector.extract_strided_slice %48 {offsets = [0, 20], sizes = [1, 4], strides = [1, 1]} : vector<1x64xf32> to vector<1x4xf32>
    %59 = arith.addf %57, %58 : vector<1x4xf32>
    %60 = vector.extract_strided_slice %48 {offsets = [0, 24], sizes = [1, 4], strides = [1, 1]} : vector<1x64xf32> to vector<1x4xf32>
    %61 = arith.addf %59, %60 : vector<1x4xf32>
    %62 = vector.extract_strided_slice %48 {offsets = [0, 28], sizes = [1, 4], strides = [1, 1]} : vector<1x64xf32> to vector<1x4xf32>
    %63 = arith.addf %61, %62 : vector<1x4xf32>
    %64 = vector.extract_strided_slice %48 {offsets = [0, 32], sizes = [1, 4], strides = [1, 1]} : vector<1x64xf32> to vector<1x4xf32>
    %65 = arith.addf %63, %64 : vector<1x4xf32>
    %66 = vector.extract_strided_slice %48 {offsets = [0, 36], sizes = [1, 4], strides = [1, 1]} : vector<1x64xf32> to vector<1x4xf32>
    %67 = arith.addf %65, %66 : vector<1x4xf32>
    %68 = vector.extract_strided_slice %48 {offsets = [0, 40], sizes = [1, 4], strides = [1, 1]} : vector<1x64xf32> to vector<1x4xf32>
    %69 = arith.addf %67, %68 : vector<1x4xf32>
    %70 = vector.extract_strided_slice %48 {offsets = [0, 44], sizes = [1, 4], strides = [1, 1]} : vector<1x64xf32> to vector<1x4xf32>
    %71 = arith.addf %69, %70 : vector<1x4xf32>
    %72 = vector.extract_strided_slice %48 {offsets = [0, 48], sizes = [1, 4], strides = [1, 1]} : vector<1x64xf32> to vector<1x4xf32>
    %73 = arith.addf %71, %72 : vector<1x4xf32>
    %74 = vector.extract_strided_slice %48 {offsets = [0, 52], sizes = [1, 4], strides = [1, 1]} : vector<1x64xf32> to vector<1x4xf32>
    %75 = arith.addf %73, %74 : vector<1x4xf32>
    %76 = vector.extract_strided_slice %48 {offsets = [0, 56], sizes = [1, 4], strides = [1, 1]} : vector<1x64xf32> to vector<1x4xf32>
    %77 = arith.addf %75, %76 : vector<1x4xf32>
    %78 = vector.extract_strided_slice %48 {offsets = [0, 60], sizes = [1, 4], strides = [1, 1]} : vector<1x64xf32> to vector<1x4xf32>
    %79 = arith.addf %77, %78 : vector<1x4xf32>
    %cst_3 = arith.constant 1.562500e-02 : f32
    %80 = vector.broadcast %cst_3 : f32 to vector<1x4xf32>
    %81 = arith.mulf %79, %80 : vector<1x4xf32>
    %c0_4 = arith.constant 0 : index
    %c0_5 = arith.constant 0 : index
    %82 = vector.load %arg1[%c0_4, %c0_5] : memref<1x4xf32, #tpu.memory_space<vmem>>, vector<1x4xf32>
    %cst_6 = arith.constant 9.99999974E-6 : f32
    %83 = vector.broadcast %cst_6 : f32 to vector<1x4xf32>
    %84 = arith.addf %81, %83 : vector<1x4xf32>
    %85 = math.rsqrt %84 : vector<1x4xf32>
    %86 = arith.mulf %82, %85 : vector<1x4xf32>
    %87 = tpu.concatenate %86, %86, %86, %86, %86, %86, %86, %86, %86, %86, %86, %86, %86, %86, %86, %86 in 1 : vector<1x4xf32>, vector<1x4xf32>, vector<1x4xf32>, vector<1x4xf32>, vector<1x4xf32>, vector<1x4xf32>, vector<1x4xf32>, vector<1x4xf32>, vector<1x4xf32>, vector<1x4xf32>, vector<1x4xf32>, vector<1x4xf32>, vector<1x4xf32>, vector<1x4xf32>, vector<1x4xf32>, vector<1x4xf32> -> vector<1x64xf32>
    %88 = vector.broadcast %87 : vector<1x64xf32> to vector<8x64xf32>
    %89 = arith.mulf %43, %88 : vector<8x64xf32>
    %c0_7 = arith.constant 0 : index
    %c0_8 = arith.constant 0 : index
    %90 = vector.load %arg2[%c0_7, %c0_8] : memref<1x4xf32, #tpu.memory_space<vmem>>, vector<1x4xf32>
    %91 = tpu.concatenate %90, %90, %90, %90, %90, %90, %90, %90, %90, %90, %90, %90, %90, %90, %90, %90 in 1 : vector<1x4xf32>, vector<1x4xf32>, vector<1x4xf32>, vector<1x4xf32>, vector<1x4xf32>, vector<1x4xf32>, vector<1x4xf32>, vector<1x4xf32>, vector<1x4xf32>, vector<1x4xf32>, vector<1x4xf32>, vector<1x4xf32>, vector<1x4xf32>, vector<1x4xf32>, vector<1x4xf32>, vector<1x4xf32> -> vector<1x64xf32>
    %92 = vector.broadcast %91 : vector<1x64xf32> to vector<8x64xf32>
    %93 = arith.addf %89, %92 : vector<8x64xf32>
    %c0_9 = arith.constant 0 : index
    %c0_10 = arith.constant 0 : index
    %94 = vector.load %arg3[%c0_9, %c0_10] : memref<64x8xf32, #tpu.memory_space<vmem>>, vector<64x8xf32>
    %cst_11 = arith.constant dense<0.000000e+00> : vector<8x8xf32>
    %95 = tpu.matmul %93, %94, %cst_11 {dimension_numbers = #tpu.dot_dimension_numbers<[1], [0], [0], [1], [0, 0, 1, 1], [], []>} : vector<8x64xf32>, vector<64x8xf32>, vector<8x8xf32> -> vector<8x8xf32>
    %c0_12 = arith.constant 0 : index
    %c0_13 = arith.constant 0 : index
    %96 = vector.load %arg4[%c0_12, %c0_13] : memref<1x8xf32, #tpu.memory_space<vmem>>, vector<1x8xf32>
    %97 = vector.broadcast %96 : vector<1x8xf32> to vector<8x8xf32>
    %98 = arith.addf %95, %97 : vector<8x8xf32>
    %99 = vector.broadcast %5 : vector<8x1xf32> to vector<8x8xf32>
    %100 = arith.mulf %98, %99 : vector<8x8xf32>
    %cst_14 = arith.constant dense<0.000000e+00> : vector<8xf32>
    %101 = vector.multi_reduction <add>, %100, %cst_14 [0] : vector<8x8xf32> to vector<8xf32>
    %102 = vector.shape_cast %101 : vector<8xf32> to vector<1x8xf32>
    %cst_15 = arith.constant 2.500000e-01 : f32
    %103 = vector.broadcast %cst_15 : f32 to vector<1x8xf32>
    %104 = arith.mulf %102, %103 : vector<1x8xf32>
    %105 = vector.broadcast %104 : vector<1x8xf32> to vector<8x8xf32>
    %106 = arith.subf %98, %105 : vector<8x8xf32>
    %107 = vector.broadcast %5 : vector<8x1xf32> to vector<8x8xf32>
    %108 = arith.mulf %106, %107 : vector<8x8xf32>
    %109 = arith.mulf %108, %108 : vector<8x8xf32>
    %cst_16 = arith.constant dense<0.000000e+00> : vector<8xf32>
    %110 = vector.multi_reduction <add>, %109, %cst_16 [0] : vector<8x8xf32> to vector<8xf32>
    %111 = vector.shape_cast %110 : vector<8xf32> to vector<1x8xf32>
    %cst_17 = arith.constant 2.500000e-01 : f32
    %112 = vector.broadcast %cst_17 : f32 to vector<1x8xf32>
    %113 = arith.mulf %111, %112 : vector<1x8xf32>
    %c0_18 = arith.constant 0 : index
    %c0_19 = arith.constant 0 : index
    %114 = vector.load %arg5[%c0_18, %c0_19] : memref<1x8xf32, #tpu.memory_space<vmem>>, vector<1x8xf32>
    %cst_20 = arith.constant 9.99999974E-6 : f32
    %115 = vector.broadcast %cst_20 : f32 to vector<1x8xf32>
    %116 = arith.addf %113, %115 : vector<1x8xf32>
    %117 = math.rsqrt %116 : vector<1x8xf32>
    %118 = arith.mulf %114, %117 : vector<1x8xf32>
    %119 = vector.broadcast %104 : vector<1x8xf32> to vector<8x8xf32>
    %120 = arith.subf %98, %119 : vector<8x8xf32>
    %121 = vector.broadcast %118 : vector<1x8xf32> to vector<8x8xf32>
    %122 = arith.mulf %120, %121 : vector<8x8xf32>
    %c0_21 = arith.constant 0 : index
    %c0_22 = arith.constant 0 : index
    %123 = vector.load %arg6[%c0_21, %c0_22] : memref<1x8xf32, #tpu.memory_space<vmem>>, vector<1x8xf32>
    %124 = vector.broadcast %123 : vector<1x8xf32> to vector<8x8xf32>
    %125 = arith.addf %122, %124 : vector<8x8xf32>
    %cst_23 = arith.constant 0.000000e+00 : f32
    %126 = vector.broadcast %cst_23 : f32 to vector<8x8xf32>
    %127 = arith.cmpf ogt, %125, %126 : vector<8x8xf32>
    %cst_24 = arith.constant 0.000000e+00 : f32
    %128 = vector.broadcast %cst_24 : f32 to vector<8x8xf32>
    %129 = arith.minimumf %125, %128 : vector<8x8xf32>
    %130 = math.exp %129 : vector<8x8xf32>
    %cst_25 = arith.constant 1.000000e+00 : f32
    %131 = vector.broadcast %cst_25 : f32 to vector<8x8xf32>
    %132 = arith.subf %130, %131 : vector<8x8xf32>
    %133 = arith.select %127, %125, %132 : vector<8x8xi1>, vector<8x8xf32>
    %c0_26 = arith.constant 0 : index
    %c0_27 = arith.constant 0 : index
    %134 = vector.load %arg7[%c0_26, %c0_27] : memref<8x128xf32, #tpu.memory_space<vmem>>, vector<8x128xf32>
    %cst_28 = arith.constant dense<0.000000e+00> : vector<8x128xf32>
    %135 = tpu.matmul %133, %134, %cst_28 {dimension_numbers = #tpu.dot_dimension_numbers<[1], [0], [0], [1], [0, 0, 1, 1], [], []>} : vector<8x8xf32>, vector<8x128xf32>, vector<8x128xf32> -> vector<8x128xf32>
    %c0_29 = arith.constant 0 : index
    %c0_30 = arith.constant 0 : index
    %136 = vector.load %arg8[%c0_29, %c0_30] : memref<1x128xf32, #tpu.memory_space<vmem>>, vector<1x128xf32>
    %137 = vector.broadcast %136 : vector<1x128xf32> to vector<8x128xf32>
    %138 = arith.addf %135, %137 : vector<8x128xf32>
    %c0_31 = arith.constant 0 : index
    %c0_32 = arith.constant 0 : index
    %139 = vector.load %arg9[%c0_31, %c0_32] : memref<8x128xf32, #tpu.memory_space<vmem>>, vector<8x128xf32>
    tpu.vector_store %arg9[%c0_31, %c0_32], %138 {strides = array<i32>} : memref<8x128xf32, #tpu.memory_space<vmem>>, vector<8x128xf32>,
    return
  }
}

</mosaic_0001>

<llo_original>
// kernel: tpu_custom_call.1
$region0: #{tpu_custom_call.1}
  #allocation0 [shape = 'u32[]', space=smem, size = 0x4, offset = 0x4, fixed_abs, tag = 'smem constant byte address 0x4 - core index']
  #allocation1 [shape = 'u32[144,128]{1,0:T(1,128)}', space=vmem, size = 0x12000, scoped, tag = 'internal scratch']
  %s0 = inlined_call_operand.vmem [shape: f32[8,64], index: 0, kind: input, shape index: {}]
  %s1 = inlined_call_operand.vmem [shape: f32[1,4], index: 1, kind: input, shape index: {}]
  %s2 = inlined_call_operand.vmem [shape: f32[1,4], index: 2, kind: input, shape index: {}]
  %s3 = inlined_call_operand.vmem [shape: f32[64,8], index: 3, kind: input, shape index: {}]
  %s4 = inlined_call_operand.vmem [shape: f32[1,8], index: 4, kind: input, shape index: {}]
  %s5 = inlined_call_operand.vmem [shape: f32[1,8], index: 5, kind: input, shape index: {}]
  %s6 = inlined_call_operand.vmem [shape: f32[1,8], index: 6, kind: input, shape index: {}]
  %s7 = inlined_call_operand.vmem [shape: f32[8,128], index: 7, kind: input, shape index: {}]
  %s8 = inlined_call_operand.vmem [shape: f32[1,128], index: 8, kind: input, shape index: {}]
  %s9 = inlined_call_operand.hbm [shape: f32[8,128], index: 9, kind: output, shape index: {}]
  %s10 = sld [smem:[#allocation0]]
  $region46: #{tpu_custom_call.1} parent=0
    _
  %s12 = ssub.s32 1, %s10
  %s13 = scalar_select 0, %s12, %s10
  $region1: #{tpu_custom_call.1} parent=0
    #allocation2 [shape = 'u8[4096]{0}', space=vmem, size = 0x1000, scoped, tag = 'output window, operand 0, single buffered']
    #allocation3 [shape = 's32[1]{0}', space=sflag, size = 0x4, scoped, tag = 'scoped memory for tpu_custom_call.1']
    %14 = vsyncpa [#allocation3], 0
    // Predicated region
    $region2: #{tpu_custom_call.1} parent=1 // pred_check
      _
    $region3: #{tpu_custom_call.1} parent=1 // pred_check_branch
      %16 = sbr.rel (0) target = $region5
    $region4: #{tpu_custom_call.1} parent=1 // pred_region
      _
    $region5: #{tpu_custom_call.1} parent=1 // pred_fallthru
      _
    // Predicated region
    $region6: #{tpu_custom_call.1} parent=1 // pred_check
      _
    $region7: #{tpu_custom_call.1} parent=1 // pred_check_branch
      %18 = sbr.rel (0) target = $region9
    $region8: #{tpu_custom_call.1} parent=1 // pred_region
      _
    $region9: #{tpu_custom_call.1} parent=1 // pred_fallthru
      _
    // Predicated region
    $region10: #{tpu_custom_call.1} parent=1 // pred_check
      _
    $region11: #{tpu_custom_call.1} parent=1 // pred_check_branch
      %20 = sbr.rel (0) target = $region13
    $region12: #{tpu_custom_call.1} parent=1 // pred_region
      _
    $region13: #{tpu_custom_call.1} parent=1 // pred_fallthru
      _
    // Predicated region
    $region14: #{tpu_custom_call.1} parent=1 // pred_check
      _
    $region15: #{tpu_custom_call.1} parent=1 // pred_check_branch
      %22 = sbr.rel (0) target = $region17
    $region16: #{tpu_custom_call.1} parent=1 // pred_region
      _
    $region17: #{tpu_custom_call.1} parent=1 // pred_fallthru
      _
    // Predicated region
    $region18: #{tpu_custom_call.1} parent=1 // pred_check
      _
    $region19: #{tpu_custom_call.1} parent=1 // pred_check_branch
      %24 = sbr.rel (0) target = $region21
    $region20: #{tpu_custom_call.1} parent=1 // pred_region
      _
    $region21: #{tpu_custom_call.1} parent=1 // pred_fallthru
      _
    // Predicated region
    $region22: #{tpu_custom_call.1} parent=1 // pred_check
      _
    $region23: #{tpu_custom_call.1} parent=1 // pred_check_branch
      %26 = sbr.rel (0) target = $region25
    $region24: #{tpu_custom_call.1} parent=1 // pred_region
      _
    $region25: #{tpu_custom_call.1} parent=1 // pred_fallthru
      _
    // Predicated region
    $region26: #{tpu_custom_call.1} parent=1 // pred_check
      _
    $region27: #{tpu_custom_call.1} parent=1 // pred_check_branch
      %28 = sbr.rel (0) target = $region29
    $region28: #{tpu_custom_call.1} parent=1 // pred_region
      _
    $region29: #{tpu_custom_call.1} parent=1 // pred_fallthru
      _
    // Predicated region
    $region30: #{tpu_custom_call.1} parent=1 // pred_check
      _
    $region31: #{tpu_custom_call.1} parent=1 // pred_check_branch
      %30 = sbr.rel (0) target = $region33
    $region32: #{tpu_custom_call.1} parent=1 // pred_region
      _
    $region33: #{tpu_custom_call.1} parent=1 // pred_fallthru
      _
    // Predicated region
    $region34: #{tpu_custom_call.1} parent=1 // pred_check
      _
    $region35: #{tpu_custom_call.1} parent=1 // pred_check_branch
      %32 = sbr.rel (0) target = $region37
    $region36: #{tpu_custom_call.1} parent=1 // pred_region
      _
    $region37: #{tpu_custom_call.1} parent=1 // pred_fallthru
      _
    %v33 = vld [vmem:[%s0] sm:$0xff]
    %v34 = vlaneseq
    %v35 = vshrl.u32 %v34, 7
    %vm36 = vcmp.lt.s32.totalorder %v35, 4
    %v37 = vsel %vm36, 1, 0
    %v38 = vcvt.s32.f32 %v37
    %vm39 = vcmask 523264
    %v40 = vsel %vm39, %v33, 0.0
    %v41 = vrot.slane %v40, 4
    %v42 = vadd.f32 %v40, %v41
    %v43 = vrot.slane %v42, 2
    %v44 = vadd.f32 %v42, %v43
    %v45 = vrot.slane %v44, 1
    %v46 = vadd.f32 %v44, %v45
    %48 = vrot.lane.b32.xlu0 %v46, 124
    %v49 = vpop.permute.xlu0 %48
    %v51 = vadd.f32 %v46, %v49
    %52 = vrot.lane.b32.xlu0 %v46, 120
    %v53 = vpop.permute.xlu0 %52
    %v55 = vadd.f32 %v51, %v53
    %56 = vrot.lane.b32.xlu0 %v46, 116
    %v57 = vpop.permute.xlu0 %56
    %v59 = vadd.f32 %v55, %v57
    %60 = vrot.lane.b32.xlu0 %v46, 112
    %v61 = vpop.permute.xlu0 %60
    %v63 = vadd.f32 %v59, %v61
    %64 = vrot.lane.b32.xlu0 %v46, 108
    %v65 = vpop.permute.xlu0 %64
    %v67 = vadd.f32 %v63, %v65
    %68 = vrot.lane.b32.xlu0 %v46, 104
    %v69 = vpop.permute.xlu0 %68
    %v71 = vadd.f32 %v67, %v69
    %72 = vrot.lane.b32.xlu0 %v46, 100
    %v73 = vpop.permute.xlu0 %72
    %v75 = vadd.f32 %v71, %v73
    %76 = vrot.lane.b32.xlu0 %v46, 96
    %v77 = vpop.permute.xlu0 %76
    %v79 = vadd.f32 %v75, %v77
    %80 = vrot.lane.b32.xlu0 %v46, 92
    %v81 = vpop.permute.xlu0 %80
    %v83 = vadd.f32 %v79, %v81
    %84 = vrot.lane.b32.xlu0 %v46, 88
    %v85 = vpop.permute.xlu0 %84
    %v87 = vadd.f32 %v83, %v85
    %88 = vrot.lane.b32.xlu0 %v46, 84
    %v89 = vpop.permute.xlu0 %88
    %v91 = vadd.f32 %v87, %v89
    %92 = vrot.lane.b32.xlu0 %v46, 80
    %v93 = vpop.permute.xlu0 %92
    %v95 = vadd.f32 %v91, %v93
    %96 = vrot.lane.b32.xlu0 %v46, 76
    %v97 = vpop.permute.xlu0 %96
    %v99 = vadd.f32 %v95, %v97
    %100 = vrot.lane.b32.xlu0 %v46, 72
    %v101 = vpop.permute.xlu0 %100
    %v103 = vadd.f32 %v99, %v101
    %104 = vrot.lane.b32.xlu0 %v46, 68
    %v105 = vpop.permute.xlu0 %104
    %v107 = vadd.f32 %v103, %v105
    %v108 = vmul.f32 %v107, 0.015625
    %110 = vrot.lane.b32.xlu0 %v108, 4
    %v111 = vpop.permute.xlu0 %110
    %113 = vrot.lane.b32.xlu0 %v108, 8
    %v114 = vpop.permute.xlu0 %113
    %116 = vrot.lane.b32.xlu0 %v108, 12
    %v117 = vpop.permute.xlu0 %116
    %119 = vrot.lane.b32.xlu0 %v108, 16
    %v120 = vpop.permute.xlu0 %119
    %122 = vrot.lane.b32.xlu0 %v108, 20
    %v123 = vpop.permute.xlu0 %122
    %125 = vrot.lane.b32.xlu0 %v108, 24
    %v126 = vpop.permute.xlu0 %125
    %128 = vrot.lane.b32.xlu0 %v108, 28
    %v129 = vpop.permute.xlu0 %128
    %131 = vrot.lane.b32.xlu0 %v108, 32
    %v132 = vpop.permute.xlu0 %131
    %134 = vrot.lane.b32.xlu0 %v108, 36
    %v135 = vpop.permute.xlu0 %134
    %137 = vrot.lane.b32.xlu0 %v108, 40
    %v138 = vpop.permute.xlu0 %137
    %140 = vrot.lane.b32.xlu0 %v108, 44
    %v141 = vpop.permute.xlu0 %140
    %143 = vrot.lane.b32.xlu0 %v108, 48
    %v144 = vpop.permute.xlu0 %143
    %146 = vrot.lane.b32.xlu0 %v108, 52
    %v147 = vpop.permute.xlu0 %146
    %149 = vrot.lane.b32.xlu0 %v108, 56
    %v150 = vpop.permute.xlu0 %149
    %152 = vrot.lane.b32.xlu0 %v108, 60
    %v153 = vpop.permute.xlu0 %152
    %vm155 = vcmask 31744
    %v156 = vsel %vm155, %v108, %v111
    %vm157 = vcmask 64512
    %v158 = vsel %vm157, %v156, %v114
    %vm159 = vcmask 97280
    %v160 = vsel %vm159, %v158, %v117
    %vm161 = vcmask 130048
    %v162 = vsel %vm161, %v160, %v120
    %vm163 = vcmask 162816
    %v164 = vsel %vm163, %v162, %v123
    %vm165 = vcmask 195584
    %v166 = vsel %vm165, %v164, %v126
    %vm167 = vcmask 228352
    %v168 = vsel %vm167, %v166, %v129
    %vm169 = vcmask 261120
    %v170 = vsel %vm169, %v168, %v132
    %vm171 = vcmask 293888
    %v172 = vsel %vm171, %v170, %v135
    %vm173 = vcmask 326656
    %v174 = vsel %vm173, %v172, %v138
    %vm175 = vcmask 359424
    %v176 = vsel %vm175, %v174, %v141
    %vm177 = vcmask 392192
    %v178 = vsel %vm177, %v176, %v144
    %vm179 = vcmask 424960
    %v180 = vsel %vm179, %v178, %v147
    %vm181 = vcmask 457728
    %v182 = vsel %vm181, %v180, %v150
    %vm183 = vcmask 490496
    %v184 = vsel %vm183, %v182, %v153
    %v185 = vlaneseq
    %v186 = vshrl.u32 %v185, 7
    %v187 = vsub.s32 0, %v186
    %v188 = vrot.slane %v184, %v187
    %v189 = vsub.f32 %v33, %v188
    %v190 = vmul.f32 %v189, %v38
    %v191 = vmul.f32 %v190, %v190
    %v192 = vsel %vm39, %v191, 0.0
    %v193 = vrot.slane %v192, 4
    %v194 = vadd.f32 %v192, %v193
    %v195 = vrot.slane %v194, 2
    %v196 = vadd.f32 %v194, %v195
    %v197 = vrot.slane %v196, 1
    %v198 = vadd.f32 %v196, %v197
    %200 = vrot.lane.b32.xlu0 %v198, 124
    %v201 = vpop.permute.xlu0 %200
    %v203 = vadd.f32 %v198, %v201
    %204 = vrot.lane.b32.xlu0 %v198, 120
    %v205 = vpop.permute.xlu0 %204
    %v207 = vadd.f32 %v203, %v205
    %208 = vrot.lane.b32.xlu0 %v198, 116
    %v209 = vpop.permute.xlu0 %208
    %v211 = vadd.f32 %v207, %v209
    %212 = vrot.lane.b32.xlu0 %v198, 112
    %v213 = vpop.permute.xlu0 %212
    %v215 = vadd.f32 %v211, %v213
    %216 = vrot.lane.b32.xlu0 %v198, 108
    %v217 = vpop.permute.xlu0 %216
    %v219 = vadd.f32 %v215, %v217
    %220 = vrot.lane.b32.xlu0 %v198, 104
    %v221 = vpop.permute.xlu0 %220
    %v223 = vadd.f32 %v219, %v221
    %224 = vrot.lane.b32.xlu0 %v198, 100
    %v225 = vpop.permute.xlu0 %224
    %v227 = vadd.f32 %v223, %v225
    %228 = vrot.lane.b32.xlu0 %v198, 96
    %v229 = vpop.permute.xlu0 %228
    %v231 = vadd.f32 %v227, %v229
    %232 = vrot.lane.b32.xlu0 %v198, 92
    %v233 = vpop.permute.xlu0 %232
    %v235 = vadd.f32 %v231, %v233
    %236 = vrot.lane.b32.xlu0 %v198, 88
    %v237 = vpop.permute.xlu0 %236
    %v239 = vadd.f32 %v235, %v237
    %240 = vrot.lane.b32.xlu0 %v198, 84
    %v241 = vpop.permute.xlu0 %240
    %v243 = vadd.f32 %v239, %v241
    %244 = vrot.lane.b32.xlu0 %v198, 80
    %v245 = vpop.permute.xlu0 %244
    %v247 = vadd.f32 %v243, %v245
    %248 = vrot.lane.b32.xlu0 %v198, 76
    %v249 = vpop.permute.xlu0 %248
    %v251 = vadd.f32 %v247, %v249
    %252 = vrot.lane.b32.xlu0 %v198, 72
    %v253 = vpop.permute.xlu0 %252
    %v255 = vadd.f32 %v251, %v253
    %256 = vrot.lane.b32.xlu0 %v198, 68
    %v257 = vpop.permute.xlu0 %256
    %v259 = vadd.f32 %v255, %v257
    %v260 = vmul.f32 %v259, 0.015625
    %v261 = vld [vmem:[%s1] sm:$0x1]
    %v262 = vadd.f32 %v260, 1e-05
    %v263 = vrsqrt.pop %v262
    %v264 = vmul.f32 %v261, %v263
    %v266 = vlaneseq
    %v267 = vshrl.u32 %v266, 7
    %v268 = vsub.s32 0, %v267
    %v269 = vrot.slane %v264, %v268
    %270 = vrot.lane.b32.xlu0 %v269, 4
    %v271 = vpop.permute.xlu0 %270
    %273 = vrot.lane.b32.xlu0 %v269, 8
    %v274 = vpop.permute.xlu0 %273
    %276 = vrot.lane.b32.xlu0 %v269, 12
    %v277 = vpop.permute.xlu0 %276
    %279 = vrot.lane.b32.xlu0 %v269, 16
    %v280 = vpop.permute.xlu0 %279
    %282 = vrot.lane.b32.xlu0 %v269, 20
    %v283 = vpop.permute.xlu0 %282
    %285 = vrot.lane.b32.xlu0 %v269, 24
    %v286 = vpop.permute.xlu0 %285
    %288 = vrot.lane.b32.xlu0 %v269, 28
    %v289 = vpop.permute.xlu0 %288
    %291 = vrot.lane.b32.xlu0 %v269, 32
    %v292 = vpop.permute.xlu0 %291
    %294 = vrot.lane.b32.xlu0 %v269, 36
    %v295 = vpop.permute.xlu0 %294
    %297 = vrot.lane.b32.xlu0 %v269, 40
    %v298 = vpop.permute.xlu0 %297
    %300 = vrot.lane.b32.xlu0 %v269, 44
    %v301 = vpop.permute.xlu0 %300
    %303 = vrot.lane.b32.xlu0 %v269, 48
    %v304 = vpop.permute.xlu0 %303
    %306 = vrot.lane.b32.xlu0 %v269, 52
    %v307 = vpop.permute.xlu0 %306
    %309 = vrot.lane.b32.xlu0 %v269, 56
    %v310 = vpop.permute.xlu0 %309
    %312 = vrot.lane.b32.xlu0 %v269, 60
    %v313 = vpop.permute.xlu0 %312
    %v315 = vsel %vm155, %v264, %v271
    %v316 = vsel %vm157, %v315, %v274
    %v317 = vsel %vm159, %v316, %v277
    %v318 = vsel %vm161, %v317, %v280
    %v319 = vsel %vm163, %v318, %v283
    %v320 = vsel %vm165, %v319, %v286
    %v321 = vsel %vm167, %v320, %v289
    %v322 = vsel %vm169, %v321, %v292
    %v323 = vsel %vm171, %v322, %v295
    %v324 = vsel %vm173, %v323, %v298
    %v325 = vsel %vm175, %v324, %v301
    %v326 = vsel %vm177, %v325, %v304
    %v327 = vsel %vm179, %v326, %v307
    %v328 = vsel %vm181, %v327, %v310
    %v329 = vsel %vm183, %v328, %v313
    %v330 = vlaneseq
    %v331 = vshrl.u32 %v330, 7
    %v332 = vsub.s32 0, %v331
    %v333 = vrot.slane %v329, %v332
    %v334 = vmul.f32 %v189, %v333
    %v335 = vld [vmem:[%s2] sm:$0x1]
    %v337 = vlaneseq
    %v338 = vshrl.u32 %v337, 7
    %v339 = vsub.s32 0, %v338
    %v340 = vrot.slane %v335, %v339
    %341 = vrot.lane.b32.xlu0 %v340, 4
    %v342 = vpop.permute.xlu0 %341
    %344 = vrot.lane.b32.xlu0 %v340, 8
    %v345 = vpop.permute.xlu0 %344
    %347 = vrot.lane.b32.xlu0 %v340, 12
    %v348 = vpop.permute.xlu0 %347
    %350 = vrot.lane.b32.xlu0 %v340, 16
    %v351 = vpop.permute.xlu0 %350
    %353 = vrot.lane.b32.xlu0 %v340, 20
    %v354 = vpop.permute.xlu0 %353
    %356 = vrot.lane.b32.xlu0 %v340, 24
    %v357 = vpop.permute.xlu0 %356
    %359 = vrot.lane.b32.xlu0 %v340, 28
    %v360 = vpop.permute.xlu0 %359
    %362 = vrot.lane.b32.xlu0 %v340, 32
    %v363 = vpop.permute.xlu0 %362
    %365 = vrot.lane.b32.xlu0 %v340, 36
    %v366 = vpop.permute.xlu0 %365
    %368 = vrot.lane.b32.xlu0 %v340, 40
    %v369 = vpop.permute.xlu0 %368
    %371 = vrot.lane.b32.xlu0 %v340, 44
    %v372 = vpop.permute.xlu0 %371
    %374 = vrot.lane.b32.xlu0 %v340, 48
    %v375 = vpop.permute.xlu0 %374
    %377 = vrot.lane.b32.xlu0 %v340, 52
    %v378 = vpop.permute.xlu0 %377
    %380 = vrot.lane.b32.xlu0 %v340, 56
    %v381 = vpop.permute.xlu0 %380
    %383 = vrot.lane.b32.xlu0 %v340, 60
    %v384 = vpop.permute.xlu0 %383
    %v386 = vsel %vm155, %v335, %v342
    %v387 = vsel %vm157, %v386, %v345
    %v388 = vsel %vm159, %v387, %v348
    %v389 = vsel %vm161, %v388, %v351
    %v390 = vsel %vm163, %v389, %v354
    %v391 = vsel %vm165, %v390, %v357
    %v392 = vsel %vm167, %v391, %v360
    %v393 = vsel %vm169, %v392, %v363
    %v394 = vsel %vm171, %v393, %v366
    %v395 = vsel %vm173, %v394, %v369
    %v396 = vsel %vm175, %v395, %v372
    %v397 = vsel %vm177, %v396, %v375
    %v398 = vsel %vm179, %v397, %v378
    %v399 = vsel %vm181, %v398, %v381
    %v400 = vsel %vm183, %v399, %v384
    %v401 = vlaneseq
    %v402 = vshrl.u32 %v401, 7
    %v403 = vsub.s32 0, %v402
    %v404 = vrot.slane %v400, %v403
    %v405 = vadd.f32 %v334, %v404
    %v406 = vld [vmem:[%s3] sm:$0xff]
    %v407 = vld [vmem:[%s3 + $0x8] sm:$0xff]
    %v408 = vld [vmem:[%s3 + $0x10] sm:$0xff]
    %v409 = vld [vmem:[%s3 + $0x18] sm:$0xff]
    %v410 = vld [vmem:[%s3 + $0x20] sm:$0xff]
    %v411 = vld [vmem:[%s3 + $0x28] sm:$0xff]
    %v412 = vld [vmem:[%s3 + $0x30] sm:$0xff]
    %v413 = vld [vmem:[%s3 + $0x38] sm:$0xff]
    %v414 = vld [vmem:[%s4] sm:$0x1]
    %v416 = vlaneseq
    %v417 = vshrl.u32 %v416, 7
    %v418 = vsub.s32 0, %v417
    %v419 = vrot.slane %v414, %v418
    %v422 = vsel %vm39, %v405, 0
    %424 = vmatprep.subr.mxu0 0.0
    %425 = vmatpush1.msra.mxu0 %v406
    %426 = vmatprep.subr.mxu0 0.0
    %427 = vmatpush1.msra.mxu0 %v407
    %428 = vmatprep.subr.mxu0 0.0
    %429 = vmatpush1.msra.mxu0 %v408
    %430 = vmatprep.subr.mxu0 0.0
    %431 = vmatpush1.msra.mxu0 %v409
    %432 = vmatprep.subr.mxu0 0.0
    %433 = vmatpush1.msra.mxu0 %v410
    %434 = vmatprep.subr.mxu0 0.0
    %435 = vmatpush1.msra.mxu0 %v411
    %436 = vmatprep.subr.mxu0 0.0
    %437 = vmatpush1.msra.mxu0 %v412
    %438 = vmatprep.subr.mxu0 0.0
    %439 = vmatpush1.msra.mxu0 %v413
    %440 = vmatprep.subr.mxu0 0.0
    %441 = vmatpush1.msra.mxu0 0.0
    %442 = vmatprep.subr.mxu0 0.0
    %443 = vmatpush1.msra.mxu0 0.0
    %444 = vmatprep.subr.mxu0 0.0
    %445 = vmatpush1.msra.mxu0 0.0
    %446 = vmatprep.subr.mxu0 0.0
    %447 = vmatpush1.msra.mxu0 0.0
    %448 = vmatprep.subr.mxu0 0.0
    %449 = vmatpush1.msra.mxu0 0.0
    %450 = vmatprep.subr.mxu0 0.0
    %451 = vmatpush1.msra.mxu0 0.0
    %452 = vmatprep.subr.mxu0 0.0
    %453 = vmatpush1.msra.mxu0 0.0
    %454 = vmatprep.subr.mxu0 0.0
    %455 = vmatpush1.msra.mxu0 0.0
    %456 = vmatprep.subr.mxu0 0.0
    %457 = vmatpush1.msra.mxu0 0.0
    %458 = vmatprep.subr.mxu0 0.0
    %459 = vmatpush1.msra.mxu0 0.0
    %460 = vmatprep.subr.mxu0 0.0
    %461 = vmatpush1.msra.mxu0 0.0
    %462 = vmatprep.subr.mxu0 0.0
    %463 = vmatpush1.msra.mxu0 0.0
    %464 = vmatprep.subr.mxu0 0.0
    %465 = vmatpush1.msra.mxu0 0.0
    %466 = vmatprep.subr.mxu0 0.0
    %467 = vmatpush1.msra.mxu0 0.0
    %468 = vmatprep.subr.mxu0 0.0
    %469 = vmatpush1.msra.mxu0 0.0
    %470 = vmatprep.subr.mxu0 0.0
    %471 = vmatpush1.msra.mxu0 0.0
    %472 = vmatprep.subr.mxu0 0.0
    %473 = vmatpush1.msra.mxu0 0.0
    %474 = vmatprep.subr.mxu0 0.0
    %475 = vmatpush1.msra.mxu0 0.0
    %476 = vmatprep.subr.mxu0 0.0
    %477 = vmatpush1.msra.mxu0 0.0
    %478 = vmatprep.subr.mxu0 0.0
    %479 = vmatpush1.msra.mxu0 0.0
    %480 = vmatprep.subr.mxu0 0.0
    %481 = vmatpush1.msra.mxu0 0.0
    %482 = vmatprep.subr.mxu0 0.0
    %483 = vmatpush1.msra.mxu0 0.0
    %484 = vmatprep.subr.mxu0 0.0
    %485 = vmatpush1.msra.mxu0 0.0
    %486 = vmatprep.subr.mxu0 0.0
    %487 = vmatpush1.msra.mxu0 0.0
    %488 = vmatprep.mubr.f32.mxu0 0.0
    %489 = vmatmul.mubr.f32.gmra.mrb[0].mxu0 %v422
    %v490 = vpop.f32.mrb[0].mxu0
    %v491 = vadd.f32 %v419, %v490
    %v492 = vpop.f32.mrb[0].mxu0
    %493 = vdwg.mxu0
    %v494 = vmul.f32 %v491, %v38
    %v495 = vsel %vm157, %v494, 0.0
    %v496 = vrot.slane %v495, 4
    %v497 = vadd.f32 %v495, %v496
    %v498 = vrot.slane %v497, 2
    %v499 = vadd.f32 %v497, %v498
    %v500 = vrot.slane %v499, 1
    %v501 = vadd.f32 %v499, %v500
    %v502 = vmul.f32 %v501, 0.25
    %v503 = vsub.f32 %v491, %v502
    %v504 = vmul.f32 %v503, %v38
    %v505 = vmul.f32 %v504, %v504
    %v506 = vsel %vm157, %v505, 0.0
    %v507 = vrot.slane %v506, 4
    %v508 = vadd.f32 %v506, %v507
    %v509 = vrot.slane %v508, 2
    %v510 = vadd.f32 %v508, %v509
    %v511 = vrot.slane %v510, 1
    %v512 = vadd.f32 %v510, %v511
    %v513 = vmul.f32 %v512, 0.25
    %v514 = vld [vmem:[%s5] sm:$0x1]
    %v515 = vadd.f32 %v513, 1e-05
    %v516 = vrsqrt.pop %v515
    %v517 = vmul.f32 %v514, %v516
    %v519 = vlaneseq
    %v520 = vshrl.u32 %v519, 7
    %v521 = vsub.s32 0, %v520
    %v522 = vrot.slane %v517, %v521
    %v524 = vmul.f32 %v503, %v522
    %v525 = vld [vmem:[%s6] sm:$0x1]
    %v527 = vlaneseq
    %v528 = vshrl.u32 %v527, 7
    %v529 = vsub.s32 0, %v528
    %v530 = vrot.slane %v525, %v529
    %v532 = vadd.f32 %v524, %v530
    %vm533 = vcmp.gt.f32.partialorder %v532, 0.0
    %v534 = vmin.f32 %v532, 0.0
    %v535 = vmul.f32 %v534, 1.442695
    %v536 = vpow.pop %v535
    %v537 = vsub.f32 %v536, 1.0
    %v538 = vsel %vm533, %v532, %v537
    %v539 = vld [vmem:[%s7] sm:$0xff]
    %v540 = vld [vmem:[%s8] sm:$0x1]
    %v542 = vlaneseq
    %v543 = vshrl.u32 %v542, 7
    %v544 = vsub.s32 0, %v543
    %v545 = vrot.slane %v540, %v544
    %v548 = vsel %vm157, %v538, 0
    %550 = vmatprep.subr.mxu0 0.0
    %551 = vmatpush1.msra.mxu0 %v539
    %552 = vmatprep.subr.mxu0 0.0
    %553 = vmatpush1.msra.mxu0 0.0
    %554 = vmatprep.subr.mxu0 0.0
    %555 = vmatpush1.msra.mxu0 0.0
    %556 = vmatprep.subr.mxu0 0.0
    %557 = vmatpush1.msra.mxu0 0.0
    %558 = vmatprep.subr.mxu0 0.0
    %559 = vmatpush1.msra.mxu0 0.0
    %560 = vmatprep.subr.mxu0 0.0
    %561 = vmatpush1.msra.mxu0 0.0
    %562 = vmatprep.subr.mxu0 0.0
    %563 = vmatpush1.msra.mxu0 0.0
    %564 = vmatprep.subr.mxu0 0.0
    %565 = vmatpush1.msra.mxu0 0.0
    %566 = vmatprep.subr.mxu0 0.0
    %567 = vmatpush1.msra.mxu0 0.0
    %568 = vmatprep.subr.mxu0 0.0
    %569 = vmatpush1.msra.mxu0 0.0
    %570 = vmatprep.subr.mxu0 0.0
    %571 = vmatpush1.msra.mxu0 0.0
    %572 = vmatprep.subr.mxu0 0.0
    %573 = vmatpush1.msra.mxu0 0.0
    %574 = vmatprep.subr.mxu0 0.0
    %575 = vmatpush1.msra.mxu0 0.0
    %576 = vmatprep.subr.mxu0 0.0
    %577 = vmatpush1.msra.mxu0 0.0
    %578 = vmatprep.subr.mxu0 0.0
    %579 = vmatpush1.msra.mxu0 0.0
    %580 = vmatprep.subr.mxu0 0.0
    %581 = vmatpush1.msra.mxu0 0.0
    %582 = vmatprep.subr.mxu0 0.0
    %583 = vmatpush1.msra.mxu0 0.0
    %584 = vmatprep.subr.mxu0 0.0
    %585 = vmatpush1.msra.mxu0 0.0
    %586 = vmatprep.subr.mxu0 0.0
    %587 = vmatpush1.msra.mxu0 0.0
    %588 = vmatprep.subr.mxu0 0.0
    %589 = vmatpush1.msra.mxu0 0.0
    %590 = vmatprep.subr.mxu0 0.0
    %591 = vmatpush1.msra.mxu0 0.0
    %592 = vmatprep.subr.mxu0 0.0
    %593 = vmatpush1.msra.mxu0 0.0
    %594 = vmatprep.subr.mxu0 0.0
    %595 = vmatpush1.msra.mxu0 0.0
    %596 = vmatprep.subr.mxu0 0.0
    %597 = vmatpush1.msra.mxu0 0.0
    %598 = vmatprep.subr.mxu0 0.0
    %599 = vmatpush1.msra.mxu0 0.0
    %600 = vmatprep.subr.mxu0 0.0
    %601 = vmatpush1.msra.mxu0 0.0
    %602 = vmatprep.subr.mxu0 0.0
    %603 = vmatpush1.msra.mxu0 0.0
    %604 = vmatprep.subr.mxu0 0.0
    %605 = vmatpush1.msra.mxu0 0.0
    %606 = vmatprep.subr.mxu0 0.0
    %607 = vmatpush1.msra.mxu0 0.0
    %608 = vmatprep.subr.mxu0 0.0
    %609 = vmatpush1.msra.mxu0 0.0
    %610 = vmatprep.subr.mxu0 0.0
    %611 = vmatpush1.msra.mxu0 0.0
    %612 = vmatprep.subr.mxu0 0.0
    %613 = vmatpush1.msra.mxu0 0.0
    %614 = vmatprep.mubr.f32.mxu0 0.0
    %615 = vmatmul.mubr.f32.gmra.mrb[0].mxu0 %v548
    %v616 = vpop.f32.mrb[0].mxu0
    %v617 = vadd.f32 %v545, %v616
    %v618 = vpop.f32.mrb[0].mxu0
    %619 = vdwg.mxu0
    %620 = vst [vmem:[#allocation2] sm:$0xff] %v617
    // Predicated region
    $region38: #{tpu_custom_call.1} parent=1 // pred_check
      _
    $region39: #{tpu_custom_call.1} parent=1 // pred_check_branch
      %622 = sbr.rel (0) target = $region41
    $region40: #{tpu_custom_call.1} parent=1 // pred_region
      %s624 = ssub.s32 128, 128
      %625 = vsyncadd [#allocation3], %s624
      %s627 = sshll.u32 [#allocation2], 4
      %s628 = int_to_ptr.vmem [resolvable:$true] %s627
      %630 = dma.vmem_to_hbm [thread:$0]  %s628, 128, %s9, [#allocation3]
    $region41: #{tpu_custom_call.1} parent=1 // pred_fallthru
      _
    // Predicated region
    $region42: #{tpu_custom_call.1} parent=1 // pred_check
      _
    $region43: #{tpu_custom_call.1} parent=1 // pred_check_branch
      %632 = sbr.rel (0) target = $region45
    $region44: #{tpu_custom_call.1} parent=1 // pred_region
      %633 = dma.done [#allocation3], 128
    $region45: #{tpu_custom_call.1} parent=1 // pred_fallthru
      _
    %634 = vsyncpa [#allocation3], 1

</llo_original>
